<compile_context>
chip_gen: v7x
topology: tpu7x:2x2x1
jax: 0.10.0
libtpu: 0.0.40
codegen_flags: <defaults>
</compile_context>

<pallas_src>
import jax
import jax.numpy as jnp
from jax.experimental import pallas as pl
from jax.experimental.pallas import tpu as pltpu


_LANE_CANDIDATES = (4096, 2048, 1024, 512, 256, 128)
_SMALL_INPUT_BYTES = 1 << 20   # below this, plain XLA wins (launch overhead)
_MIN_LANES = 128


def _temperature_kernel(beta_ref, x_ref, o_ref):
    # beta_ref: (1, 1) f32 scalar in SMEM; x_ref / o_ref: VMEM tiles.
    beta = beta_ref[0, 0].astype(x_ref.dtype)
    o_ref[...] = x_ref[...] * beta


def _sublane_multiple(dtype):
    itemsize = jnp.dtype(dtype).itemsize
    if itemsize >= 4:
        return 8
    if itemsize == 2:
        return 16
    return 32


def _generation_params():
    """(target block bytes, min parallel grid steps) per TPU generation."""
    kind = ""
    try:
        kind = jax.devices()[0].device_kind.lower()
    except Exception:
        pass
    if "v7" in kind or "7x" in kind:
        # ~3.2 TB/s HBM per TC, 64 MiB VMEM, 2 TensorCores/chip.
        return 6 * 1024 * 1024, 2
    if "v6" in kind:
        # ~1.4 TB/s HBM, 128 MiB VMEM.
        return 4 * 1024 * 1024, 1
    # v5e and unknown chips: ~0.8 TB/s HBM, 16 MiB default scoped VMEM.
    return 2 * 1024 * 1024, 1


def _pick_row_block(rows, lanes, itemsize, sub, target_bytes, min_grid):
    if rows <= sub:
        return rows  # block covers the full sublane extent (always legal)
    br = (target_bytes // (lanes * itemsize)) // sub * sub
    br = max(sub, min(br, (rows // sub) * sub))
    if min_grid > 1 and rows >= min_grid * sub:
        # Ensure >= min_grid grid steps so both v7x TensorCores get work.
        cap = max(sub, (pl.cdiv(rows, min_grid) // sub) * sub)
        br = min(br, cap)
    return br


def temperature_forward(values, beta, *, min_pallas_bytes=_SMALL_INPUT_BYTES):
    """Compute values * beta with a Pallas TPU kernel (any shape, float dtype)."""
    orig_shape = values.shape
    dtype = values.dtype
    itemsize = jnp.dtype(dtype).itemsize

    n = 1
    for d in orig_shape:
        n *= int(d)

    beta_cast = jnp.asarray(beta, dtype=dtype)

    # Small / empty inputs: the kernel launch overhead dwarfs the DMA time.
    if n == 0 or n * itemsize < min_pallas_bytes:
        return values * beta_cast

    target_bytes, min_grid = _generation_params()
    sub = _sublane_multiple(dtype)
    flat = values.reshape(-1)  # metadata-only reshape for default layouts

    # --- Pick a lane-dense, padding-free 2D view (rows, lanes). ---
    lanes = None
    if n % 128 == 0:
        # Prefer lane widths whose row count is also sublane-aligned so no
        # grid block needs masked partial-sublane stores.
        for cand in _LANE_CANDIDATES:
            if n % cand == 0 and (n // cand) % sub == 0:
                lanes = cand
                break
        if lanes is None:
            for cand in _LANE_CANDIDATES:
                if n % cand == 0:
                    lanes = cand
                    break
    else:
        # n not a multiple of 128: any divisor `lanes` >= 128 works because the
        # block's last dim equals the full view width.  Keep (sub, lanes) within
        # the block budget, prefer sublane-aligned row counts, lanes as large
        # as possible.
        upper = min(target_bytes // (sub * itemsize), n // sub)
        best_any = None
        for cand in range(upper, _MIN_LANES - 1, -1):
            if n % cand:
                continue
            if best_any is None:
                best_any = cand
            if (n // cand) % sub == 0:
                lanes = cand
                break
        if lanes is None:
            lanes = best_any
        if lanes is None:
            # Truly indivisible sizes: a (1, n) view would be sublane-sparse
            # (~1/8 VMEM bandwidth); plain XLA is faster and simpler.
            return values * beta_cast

    rows = n // lanes
    x2d = flat.reshape(rows, lanes)
    br = _pick_row_block(rows, lanes, itemsize, sub, target_bytes, min_grid)
    block = (br, lanes)
    grid = (pl.cdiv(rows, br),)

    beta_arr = jnp.asarray(beta, dtype=jnp.float32).reshape(1, 1)
    # Scoped VMEM: (in + out) x double buffering x one block, plus slack.
    vmem_limit = max(16 << 20, min(48 << 20, 4 * br * lanes * itemsize + (4 << 20)))

    out2d = pl.pallas_call(
        _temperature_kernel,
        out_shape=jax.ShapeDtypeStruct((rows, lanes), dtype),
        grid=grid,
        in_specs=[
            pl.BlockSpec(memory_space=pltpu.SMEM),   # beta (1, 1) scalar
            pl.BlockSpec(block, lambda i: (i, 0)),
        ],
        out_specs=pl.BlockSpec(block, lambda i: (i, 0)),
        compiler_params=pltpu.CompilerParams(
            dimension_semantics=("parallel",),
            vmem_limit_bytes=int(vmem_limit),
        ),
        cost_estimate=pl.CostEstimate(
            flops=n, transcendentals=0, bytes_accessed=2 * n * itemsize + 4
        ),
    )(beta_arr, x2d)

    return out2d.reshape(orig_shape)


if __name__ == "__main__":
    key = jax.random.PRNGKey(0)
    k_beta, k_x, k_y = jax.random.split(key, 3)

    # Parameter init mimicking 0.01 * torch.randn([]).
    beta = 0.01 * jax.random.normal(k_beta, (), dtype=jnp.float32)

    # 1) Lane-dense path (element count multiple of 128), kernel forced on.
    x = jax.random.normal(k_x, (2, 4, 16, 16), dtype=jnp.float32)
    y = temperature_forward(x, beta, min_pallas_bytes=0)
    jax.block_until_ready(y)
    assert y.shape == x.shape and y.dtype == x.dtype
    assert jnp.allclose(y, x * beta, atol=1e-6, rtol=1e-6)

    # 2) Ragged path (element count NOT a multiple of 128), kernel forced on.
    z = jax.random.normal(k_y, (3, 40, 24), dtype=jnp.float32)
    yz = temperature_forward(z, beta, min_pallas_bytes=0)
    jax.block_until_ready(yz)
    assert yz.shape == z.shape and yz.dtype == z.dtype
    assert jnp.allclose(yz, z * beta, atol=1e-6, rtol=1e-6)

    # 3) Default small-input bailout (plain XLA).
    ys = temperature_forward(x, beta)
    jax.block_until_ready(ys)
    assert jnp.allclose(ys, x * beta, atol=1e-6, rtol=1e-6)

    print("KERNEL_OK")
</pallas_src>

<mosaic_0001>
module attributes {stable_mosaic.version = 11 : i64} {
  func.func @_temperature_kernel(%arg0: i32, %arg1: memref<1x1xf32, #tpu.memory_space<smem>>, %arg2: memref<8x256xf32, #tpu.memory_space<vmem>>, %arg3: memref<8x256xf32, #tpu.memory_space<vmem>>) attributes {dimension_semantics = [#tpu.dimension_semantics<parallel>], iteration_bounds = array<i64: 1>, scalar_prefetch = 0 : i64, scratch_operands = 0 : i64, tpu.core_type = #tpu.core_type<tc>, window_params = [{transform_indices = @transform_0, window_bounds = array<i64: 1, 1>}, {transform_indices = @transform_1, window_bounds = array<i64: 8, 256>}, {transform_indices = @transform_2, window_bounds = array<i64: 8, 256>}]} {
    %c0 = arith.constant 0 : index
    %c0_0 = arith.constant 0 : index
    %0 = memref.load %arg1[%c0, %c0_0] : memref<1x1xf32, #tpu.memory_space<smem>>
    %c0_1 = arith.constant 0 : index
    %c0_2 = arith.constant 0 : index
    %1 = vector.load %arg2[%c0_1, %c0_2] : memref<8x256xf32, #tpu.memory_space<vmem>>, vector<8x256xf32>
    %2 = vector.broadcast %0 : f32 to vector<8x256xf32>
    %3 = arith.mulf %1, %2 : vector<8x256xf32>
    %c0_3 = arith.constant 0 : index
    %c0_4 = arith.constant 0 : index
    %4 = vector.load %arg3[%c0_3, %c0_4] : memref<8x256xf32, #tpu.memory_space<vmem>>, vector<8x256xf32>
    tpu.vector_store %arg3[%c0_3, %c0_4], %3 {strides = array<i32>} : memref<8x256xf32, #tpu.memory_space<vmem>>, vector<8x256xf32>,
    return
  }
  func.func @transform_0(%arg0: i32) -> (i32, i32) {
    %c0_i32 = arith.constant 0 : i32
    %c0_i32_0 = arith.constant 0 : i32
    %c0_i32_1 = arith.constant 0 : i32
    return %c0_i32, %c0_i32_0 : i32, i32
  }
  func.func @transform_1(%arg0: i32) -> (i32, i32) {
    %c0_i32 = arith.constant 0 : i32
    %c0_i32_0 = arith.constant 0 : i32
    return %arg0, %c0_i32 : i32, i32
  }
  func.func @transform_2(%arg0: i32) -> (i32, i32) {
    %c0_i32 = arith.constant 0 : i32
    %c0_i32_0 = arith.constant 0 : i32
    return %arg0, %c0_i32 : i32, i32
  }
}

</mosaic_0001>

<llo_original>
// kernel: tpu_custom_call.1
$region0: #{tpu_custom_call.1}
  #allocation0 [shape = 'u32[]', space=smem, size = 0x4, offset = 0x4, fixed_abs, tag = 'smem constant byte address 0x4 - core index']
  #allocation1 [shape = 'u32[144,128]{1,0:T(1,128)}', space=vmem, size = 0x12000, scoped, tag = 'internal scratch']
  #allocation2 [shape = 'f32[1,1]{1,0:T(1,128)S(6)}', space=smem, size = 0x200, scoped, tag = 'scoped memory for tpu_custom_call.1']
  %s0 = inlined_call_operand.<no memory space> [shape: f32[1,1], index: 0, kind: input, shape index: {}]
  %s1 = inlined_call_operand.hbm [shape: f32[8,256], index: 1, kind: input, shape index: {}]
  %s2 = inlined_call_operand.hbm [shape: f32[8,256], index: 2, kind: output, shape index: {}]
  %s3 = sld [smem:[#allocation0]]
  $region22: #{tpu_custom_call.1} parent=0
    _
  %s5 = ssub.s32 1, %s3
  %s6 = scalar_select 0, %s5, %s3
  %7 = sst [smem:[#allocation2]] %s0
  $region1: #{tpu_custom_call.1} parent=0
    #allocation3 [shape = 'u8[8192]{0}', space=vmem, size = 0x2000, scoped, tag = 'input window, operand 1, single buffered']
    #allocation4 [shape = 's32[1]{0}', space=sflag, size = 0x4, scoped, tag = 'scoped memory for tpu_custom_call.1']
    #allocation5 [shape = 's32[1]{0}', space=sflag, size = 0x4, scoped, tag = 'scoped memory for tpu_custom_call.1']
    #allocation6 [shape = 'u8[8192]{0}', space=vmem, size = 0x2000, scoped, tag = 'output window, operand 0, single buffered']
    %8 = vsyncpa [#allocation4], 0
    %9 = vsyncpa [#allocation5], 0
    // Predicated region
    $region2: #{tpu_custom_call.1} parent=1 // pred_check
      _
    $region3: #{tpu_custom_call.1} parent=1 // pred_check_branch
      %11 = sbr.rel (0) target = $region5
    $region4: #{tpu_custom_call.1} parent=1 // pred_region
      _
    $region5: #{tpu_custom_call.1} parent=1 // pred_fallthru
      _
    // Predicated region
    $region6: #{tpu_custom_call.1} parent=1 // pred_check
      _
    $region7: #{tpu_custom_call.1} parent=1 // pred_check_branch
      %13 = sbr.rel (0) target = $region9
    $region8: #{tpu_custom_call.1} parent=1 // pred_region
      %s15 = ssub.s32 256, 256
      %16 = vsyncadd [#allocation4], %s15
      %s18 = sshll.u32 [#allocation3], 4
      %s19 = int_to_ptr.vmem [resolvable:$true] %s18
      %21 = dma.hbm_to_vmem [thread:$0]  %s1, 256, %s19, [#allocation4]
    $region9: #{tpu_custom_call.1} parent=1 // pred_fallthru
      _
    // Predicated region
    $region10: #{tpu_custom_call.1} parent=1 // pred_check
      _
    $region11: #{tpu_custom_call.1} parent=1 // pred_check_branch
      %23 = sbr.rel (0) target = $region13
    $region12: #{tpu_custom_call.1} parent=1 // pred_region
      %24 = dma.done [#allocation4], 256
    $region13: #{tpu_custom_call.1} parent=1 // pred_fallthru
      _
    %s25 = sld [smem:[#allocation2]]
    %v26 = vld [vmem:[#allocation3] sm:$0xff]
    %v27 = vld [vmem:[#allocation3 + $0x8] sm:$0xff]
    %v28 = vstv %s25
    %v29 = vmul.f32 %v26, %v28
    %v30 = vmul.f32 %v27, %v28
    %31 = vst [vmem:[#allocation6] sm:$0xff] %v29
    %32 = vst [vmem:[#allocation6 + $0x8] sm:$0xff] %v30
    // Predicated region
    $region14: #{tpu_custom_call.1} parent=1 // pred_check
      _
    $region15: #{tpu_custom_call.1} parent=1 // pred_check_branch
      %34 = sbr.rel (0) target = $region17
    $region16: #{tpu_custom_call.1} parent=1 // pred_region
      %s36 = ssub.s32 256, 256
      %37 = vsyncadd [#allocation5], %s36
      %s39 = sshll.u32 [#allocation6], 4
      %s40 = int_to_ptr.vmem [resolvable:$true] %s39
      %42 = dma.vmem_to_hbm [thread:$0]  %s40, 256, %s2, [#allocation5]
    $region17: #{tpu_custom_call.1} parent=1 // pred_fallthru
      _
    // Predicated region
    $region18: #{tpu_custom_call.1} parent=1 // pred_check
      _
    $region19: #{tpu_custom_call.1} parent=1 // pred_check_branch
      %44 = sbr.rel (0) target = $region21
    $region20: #{tpu_custom_call.1} parent=1 // pred_region
      %45 = dma.done [#allocation5], 256
    $region21: #{tpu_custom_call.1} parent=1 // pred_fallthru
      _
    %46 = vsyncpa [#allocation4], 1
    %47 = vsyncpa [#allocation5], 1

</llo_original>
